<compile_context>
chip_gen: v6e
topology: v6e:2x2x1
jax: 0.10.0
libtpu: 0.0.40
codegen_flags: <defaults>
</compile_context>

<pallas_src>
import functools

import jax
import jax.numpy as jnp
from jax import lax
from jax.experimental import pallas as pl
from jax.experimental.pallas import tpu as pltpu


def _depthconv1d_kernel(alpha_ref,                     # SMEM (2,): [prelu1_alpha, prelu2_alpha]
                        x_ref,                         # VMEM (1, Cin, L)
                        w1_ref, b1_ref,                # (H, Cin), (H, 1)
                        g1w_ref, g1b_ref,              # (H, 1), (H, 1)
                        dw_ref, db_ref,                # (H, K), (H, 1)
                        g2w_ref, g2b_ref,              # (H, 1), (H, 1)
                        wr_ref, br_ref,                # (Cin, H), (Cin, 1)
                        ws_ref, bs_ref,                # (Cin, H), (Cin, 1)
                        res_ref, skip_ref,             # VMEM (1, Cin, L) each
                        *, kernel, dilation, padding, eps):
    """Whole DepthConv1d forward for one batch sample, fully resident in VMEM."""
    x = x_ref[0]                                       # [Cin, L]
    L = x.shape[1]
    H = dw_ref.shape[0]

    a1 = alpha_ref[0]
    a2 = alpha_ref[1]

    def group_norm(h, gamma, beta):
        # GroupNorm(num_groups=1): normalize over the whole (H, L) tile, per-channel affine.
        # Single-pass stats: one reduction sweep (sum + sum-of-squares) instead of two.
        n = float(h.shape[0] * h.shape[1])
        s = jnp.sum(h)
        ss = jnp.sum(h * h)
        mean = s / n
        var = jnp.maximum(ss / n - mean * mean, 0.0)
        return (h - mean) * lax.rsqrt(var + eps) * gamma + beta

    # -- 1x1 conv (W @ x on the native channel-first layout) -> PReLU -> GroupNorm --
    h = jnp.dot(w1_ref[...], x, preferred_element_type=jnp.float32) + b1_ref[...]
    h = jnp.where(h >= 0.0, h, a1 * h)
    h = group_norm(h, g1w_ref[...], g1b_ref[...])

    # -- depthwise conv: halo handled in-VMEM (pltpu.roll + boundary mask), no host pad --
    col = lax.broadcasted_iota(jnp.int32, (H, L), 1)
    y = None
    for t in range(kernel):                            # static unroll over taps
        off = t * dilation - padding                   # static python int
        w_t = dw_ref[:, t:t + 1]                       # [H, 1] tap weight (hoisted)
        if off == 0:
            tap = h
        else:
            tap = pltpu.roll(h, shift=(-off) % L, axis=1)   # tap[:, l] = h[:, (l + off) % L]
            if off > 0:
                tap = jnp.where(col < L - off, tap, 0.0)    # zero beyond the right edge
            else:
                tap = jnp.where(col >= -off, tap, 0.0)      # zero beyond the left edge
        term = w_t * tap
        y = term if y is None else y + term
    y = y + db_ref[...]

    # -- PReLU -> GroupNorm -> residual / skip 1x1 convs (epilogues fused) --
    h = jnp.where(y >= 0.0, y, a2 * y)
    h = group_norm(h, g2w_ref[...], g2b_ref[...])
    res_ref[0] = (jnp.dot(wr_ref[...], h, preferred_element_type=jnp.float32)
                  + br_ref[...]).astype(res_ref.dtype)
    skip_ref[0] = (jnp.dot(ws_ref[...], h, preferred_element_type=jnp.float32)
                   + bs_ref[...]).astype(skip_ref.dtype)


def depth_conv1d(x, params, *, kernel, padding, dilation=1, eps=1e-8):
    """Fused DepthConv1d forward. x: [B, Cin, L] -> (residual [B, Cin, L], skip [B, Cin, L])."""
    B, Cin, L = x.shape
    # This block is always used with length-preserving ('same') depthwise convs.
    assert 2 * padding == dilation * (kernel - 1), "kernel assumes length-preserving conv"

    col2 = lambda v: v.reshape(-1, 1).astype(jnp.float32)
    full = lambda a: pl.BlockSpec(a.shape, lambda b: (0, 0))
    samp = lambda: pl.BlockSpec((1, Cin, L), lambda b: (b, 0, 0))

    alphas = jnp.stack([params['alpha1'], params['alpha2']]).astype(jnp.float32)
    w1 = params['w1'].astype(jnp.float32)
    dw = params['dw'].astype(jnp.float32)
    wr = params['wr'].astype(jnp.float32)
    ws = params['ws'].astype(jnp.float32)
    b1, g1w, g1b = col2(params['b1']), col2(params['g1w']), col2(params['g1b'])
    db, g2w, g2b = col2(params['db']), col2(params['g2w']), col2(params['g2b'])
    br, bs = col2(params['br']), col2(params['bs'])

    kern = functools.partial(_depthconv1d_kernel, kernel=kernel,
                             dilation=dilation, padding=padding, eps=eps)
    return pl.pallas_call(
        kern,
        grid=(B,),
        in_specs=[
            pl.BlockSpec(memory_space=pltpu.MemorySpace.SMEM),   # PReLU alphas (scalars)
            samp(),                                              # x (per-sample tile)
            full(w1), full(b1), full(g1w), full(g1b),
            full(dw), full(db), full(g2w), full(g2b),
            full(wr), full(br), full(ws), full(bs),
        ],
        out_specs=(samp(), samp()),
        out_shape=(jax.ShapeDtypeStruct((B, Cin, L), jnp.float32),
                   jax.ShapeDtypeStruct((B, Cin, L), jnp.float32)),
        compiler_params=pltpu.CompilerParams(
            dimension_semantics=("parallel",)),                  # v7x: batch over 2 TCs
    )(alphas, x.astype(jnp.float32), w1, b1, g1w, g1b, dw, db, g2w, g2b, wr, br, ws, bs)


# ----------------------------- pure-JAX reference ------------------------------

def depth_conv1d_reference(x, p, *, kernel, padding, dilation=1, eps=1e-8):
    """Reference implementation matching the PyTorch module (eval mode)."""
    def gn(h, g, b):
        mean = jnp.mean(h, axis=(1, 2), keepdims=True)
        var = jnp.mean(jnp.square(h - mean), axis=(1, 2), keepdims=True)
        return (h - mean) / jnp.sqrt(var + eps) * g[None, :, None] + b[None, :, None]

    def prelu(h, a):
        return jnp.where(h >= 0, h, a * h)

    H = p['dw'].shape[0]
    h = jnp.einsum('hc,bcl->bhl', p['w1'], x) + p['b1'][None, :, None]
    h = gn(prelu(h, p['alpha1']), p['g1w'], p['g1b'])
    h = lax.conv_general_dilated(
        h, p['dw'][:, None, :], window_strides=(1,), padding=[(padding, padding)],
        rhs_dilation=(dilation,), dimension_numbers=('NCH', 'OIH', 'NCH'),
        feature_group_count=H) + p['db'][None, :, None]
    h = gn(prelu(h, p['alpha2']), p['g2w'], p['g2b'])
    res = jnp.einsum('ch,bhl->bcl', p['wr'], h) + p['br'][None, :, None]
    skip = jnp.einsum('ch,bhl->bcl', p['ws'], h) + p['bs'][None, :, None]
    return res, skip


# ----------------------------- deterministic params ----------------------------

def init_params(key, input_channel, hidden_channel, kernel):
    ks = jax.random.split(key, 10)
    rnd = lambda k, shape, s=0.2: s * jax.random.normal(k, shape, dtype=jnp.float32)
    H, C = hidden_channel, input_channel
    return dict(
        w1=rnd(ks[0], (H, C)), b1=rnd(ks[1], (H,)),
        alpha1=jnp.asarray(0.25, jnp.float32),                     # nn.PReLU() default
        g1w=1.0 + 0.1 * jax.random.normal(ks[2], (H,), dtype=jnp.float32),
        g1b=0.1 * jax.random.normal(ks[3], (H,), dtype=jnp.float32),
        dw=rnd(ks[4], (H, kernel)), db=rnd(ks[5], (H,)),
        alpha2=jnp.asarray(0.25, jnp.float32),
        g2w=1.0 + 0.1 * jax.random.normal(ks[6], (H,), dtype=jnp.float32),
        g2b=0.1 * jax.random.normal(ks[7], (H,), dtype=jnp.float32),
        wr=rnd(ks[8], (C, H)), br=rnd(ks[8], (C,)),
        ws=rnd(ks[9], (C, H)), bs=rnd(ks[9], (C,)),
    )


# ----------------------------- main ---------------------------------------------

if __name__ == "__main__":
    B, Cin, H, L = 2, 8, 16, 128        # L multiple of 128 -> lane-dense tiles & stores
    kernel, padding, dilation = 3, 1, 1

    key = jax.random.PRNGKey(0)
    kp, kx = jax.random.split(key)
    params = init_params(kp, Cin, H, kernel)
    x = jax.random.normal(kx, (B, Cin, L), dtype=jnp.float32)

    fwd = jax.jit(functools.partial(depth_conv1d, kernel=kernel,
                                    padding=padding, dilation=dilation))
    res, skip = fwd(x, params)
    res, skip = jax.block_until_ready((res, skip))

    assert res.shape == (B, Cin, L) and skip.shape == (B, Cin, L)
    assert bool(jnp.all(jnp.isfinite(res))) and bool(jnp.all(jnp.isfinite(skip)))

    # Correctness check against the pure-JAX reference. Tolerance covers default-precision
    # MXU bf16 passes for f32 matmuls (both paths) vs. XLA's own default-precision dots.
    ref_res, ref_skip = depth_conv1d_reference(x, params, kernel=kernel,
                                               padding=padding, dilation=dilation)
    assert bool(jnp.allclose(res, ref_res, atol=2e-2, rtol=2e-2)), \
        float(jnp.max(jnp.abs(res - ref_res)))
    assert bool(jnp.allclose(skip, ref_skip, atol=2e-2, rtol=2e-2)), \
        float(jnp.max(jnp.abs(skip - ref_skip)))

    print("KERNEL_OK")
</pallas_src>

<mosaic_0001>
module attributes {stable_mosaic.version = 11 : i64} {
  func.func @_depthconv1d_kernel(%arg0: i32, %arg1: memref<2xf32, #tpu.memory_space<smem>>, %arg2: memref<1x8x128xf32, #tpu.memory_space<vmem>>, %arg3: memref<16x8xf32, #tpu.memory_space<vmem>>, %arg4: memref<16x1xf32, #tpu.memory_space<vmem>>, %arg5: memref<16x1xf32, #tpu.memory_space<vmem>>, %arg6: memref<16x1xf32, #tpu.memory_space<vmem>>, %arg7: memref<16x3xf32, #tpu.memory_space<vmem>>, %arg8: memref<16x1xf32, #tpu.memory_space<vmem>>, %arg9: memref<16x1xf32, #tpu.memory_space<vmem>>, %arg10: memref<16x1xf32, #tpu.memory_space<vmem>>, %arg11: memref<8x16xf32, #tpu.memory_space<vmem>>, %arg12: memref<8x1xf32, #tpu.memory_space<vmem>>, %arg13: memref<8x16xf32, #tpu.memory_space<vmem>>, %arg14: memref<8x1xf32, #tpu.memory_space<vmem>>, %arg15: memref<1x8x128xf32, #tpu.memory_space<vmem>>, %arg16: memref<1x8x128xf32, #tpu.memory_space<vmem>>) attributes {dimension_semantics = [#tpu.dimension_semantics<parallel>], iteration_bounds = array<i64: 2>, scalar_prefetch = 0 : i64, scratch_operands = 0 : i64, tpu.core_type = #tpu.core_type<tc>, window_params = [{transform_indices = @transform_0, window_bounds = array<i64: 2>}, {transform_indices = @transform_1, window_bounds = array<i64: 1, 8, 128>}, {pipeline_mode = #tpu.pipeline_mode<synchronous>, transform_indices = @transform_2, window_bounds = array<i64: 16, 8>}, {pipeline_mode = #tpu.pipeline_mode<synchronous>, transform_indices = @transform_3, window_bounds = array<i64: 16, 1>}, {pipeline_mode = #tpu.pipeline_mode<synchronous>, transform_indices = @transform_4, window_bounds = array<i64: 16, 1>}, {pipeline_mode = #tpu.pipeline_mode<synchronous>, transform_indices = @transform_5, window_bounds = array<i64: 16, 1>}, {pipeline_mode = #tpu.pipeline_mode<synchronous>, transform_indices = @transform_6, window_bounds = array<i64: 16, 3>}, {pipeline_mode = #tpu.pipeline_mode<synchronous>, transform_indices = @transform_7, window_bounds = array<i64: 16, 1>}, {pipeline_mode = #tpu.pipeline_mode<synchronous>, transform_indices = @transform_8, window_bounds = array<i64: 16, 1>}, {pipeline_mode = #tpu.pipeline_mode<synchronous>, transform_indices = @transform_9, window_bounds = array<i64: 16, 1>}, {pipeline_mode = #tpu.pipeline_mode<synchronous>, transform_indices = @transform_10, window_bounds = array<i64: 8, 16>}, {pipeline_mode = #tpu.pipeline_mode<synchronous>, transform_indices = @transform_11, window_bounds = array<i64: 8, 1>}, {pipeline_mode = #tpu.pipeline_mode<synchronous>, transform_indices = @transform_12, window_bounds = array<i64: 8, 16>}, {pipeline_mode = #tpu.pipeline_mode<synchronous>, transform_indices = @transform_13, window_bounds = array<i64: 8, 1>}, {transform_indices = @transform_14, window_bounds = array<i64: 1, 8, 128>}, {transform_indices = @transform_15, window_bounds = array<i64: 1, 8, 128>}]} {
    %c0 = arith.constant 0 : index
    %c0_0 = arith.constant 0 : index
    %c0_1 = arith.constant 0 : index
    %0 = vector.load %arg2[%c0, %c0_0, %c0_1] : memref<1x8x128xf32, #tpu.memory_space<vmem>>, vector<1x8x128xf32>
    %1 = vector.shape_cast %0 : vector<1x8x128xf32> to vector<8x128xf32>
    %c0_2 = arith.constant 0 : index
    %2 = memref.load %arg1[%c0_2] : memref<2xf32, #tpu.memory_space<smem>>
    %c1 = arith.constant 1 : index
    %3 = memref.load %arg1[%c1] : memref<2xf32, #tpu.memory_space<smem>>
    %c0_3 = arith.constant 0 : index
    %c0_4 = arith.constant 0 : index
    %4 = vector.load %arg3[%c0_3, %c0_4] : memref<16x8xf32, #tpu.memory_space<vmem>>, vector<16x8xf32>
    %cst = arith.constant dense<0.000000e+00> : vector<16x128xf32>
    %5 = tpu.matmul %4, %1, %cst {dimension_numbers = #tpu.dot_dimension_numbers<[1], [0], [0], [1], [0, 0, 1, 1], [], []>} : vector<16x8xf32>, vector<8x128xf32>, vector<16x128xf32> -> vector<16x128xf32>
    %c0_5 = arith.constant 0 : index
    %c0_6 = arith.constant 0 : index
    %6 = vector.load %arg4[%c0_5, %c0_6] : memref<16x1xf32, #tpu.memory_space<vmem>>, vector<16x1xf32>
    %7 = vector.broadcast %6 : vector<16x1xf32> to vector<16x128xf32>
    %8 = arith.addf %5, %7 : vector<16x128xf32>
    %cst_7 = arith.constant 0.000000e+00 : f32
    %9 = vector.broadcast %cst_7 : f32 to vector<16x128xf32>
    %10 = arith.cmpf oge, %8, %9 : vector<16x128xf32>
    %11 = vector.broadcast %2 : f32 to vector<16x128xf32>
    %12 = arith.mulf %11, %8 : vector<16x128xf32>
    %13 = arith.select %10, %8, %12 : vector<16x128xi1>, vector<16x128xf32>
    %c0_8 = arith.constant 0 : index
    %c0_9 = arith.constant 0 : index
    %14 = vector.load %arg5[%c0_8, %c0_9] : memref<16x1xf32, #tpu.memory_space<vmem>>, vector<16x1xf32>
    %c0_10 = arith.constant 0 : index
    %c0_11 = arith.constant 0 : index
    %15 = vector.load %arg6[%c0_10, %c0_11] : memref<16x1xf32, #tpu.memory_space<vmem>>, vector<16x1xf32>
    %16 = vector.shape_cast %13 : vector<16x128xf32> to vector<1x16x128xf32>
    %cst_12 = arith.constant dense<0.000000e+00> : vector<1xf32>
    %17 = vector.multi_reduction <add>, %16, %cst_12 [1, 2] : vector<1x16x128xf32> to vector<1xf32>
    %18 = vector.shape_cast %17 : vector<1xf32> to vector<1x1x1xf32>
    %19 = vector.extract %18[0, 0, 0] : f32 from vector<1x1x1xf32>
    %20 = arith.mulf %13, %13 : vector<16x128xf32>
    %21 = vector.shape_cast %20 : vector<16x128xf32> to vector<1x16x128xf32>
    %cst_13 = arith.constant dense<0.000000e+00> : vector<1xf32>
    %22 = vector.multi_reduction <add>, %21, %cst_13 [1, 2] : vector<1x16x128xf32> to vector<1xf32>
    %23 = vector.shape_cast %22 : vector<1xf32> to vector<1x1x1xf32>
    %24 = vector.extract %23[0, 0, 0] : f32 from vector<1x1x1xf32>
    %cst_14 = arith.constant 2.048000e+03 : f32
    %25 = arith.divf %19, %cst_14 : f32
    %cst_15 = arith.constant 2.048000e+03 : f32
    %26 = arith.divf %24, %cst_15 : f32
    %27 = arith.mulf %25, %25 : f32
    %28 = arith.subf %26, %27 : f32
    %cst_16 = arith.constant 0.000000e+00 : f32
    %29 = arith.maximumf %28, %cst_16 : f32
    %30 = vector.broadcast %25 : f32 to vector<16x128xf32>
    %31 = arith.subf %13, %30 : vector<16x128xf32>
    %cst_17 = arith.constant 9.99999993E-9 : f32
    %32 = arith.addf %29, %cst_17 : f32
    %33 = math.rsqrt %32 : f32
    %34 = vector.broadcast %33 : f32 to vector<16x128xf32>
    %35 = arith.mulf %31, %34 : vector<16x128xf32>
    %36 = vector.broadcast %14 : vector<16x1xf32> to vector<16x128xf32>
    %37 = arith.mulf %35, %36 : vector<16x128xf32>
    %38 = vector.broadcast %15 : vector<16x1xf32> to vector<16x128xf32>
    %39 = arith.addf %37, %38 : vector<16x128xf32>
    %40 = tpu.iota {dimensions = array<i32: 1>} : vector<16x128xi32>
    %c0_18 = arith.constant 0 : index
    %c0_19 = arith.constant 0 : index
    %41 = vector.load %arg7[%c0_18, %c0_19] : memref<16x3xf32, #tpu.memory_space<vmem>>, vector<16x1xf32>
    %c1_i32 = arith.constant 1 : i32
    %42 = tpu.dynamic_rotate %39 by %c1_i32 dim 1 : vector<16x128xf32>, i32 -> vector<16x128xf32>
    %c1_i32_20 = arith.constant 1 : i32
    %43 = vector.broadcast %c1_i32_20 : i32 to vector<16x128xi32>
    %44 = arith.cmpi sge, %40, %43 : vector<16x128xi32>
    %cst_21 = arith.constant 0.000000e+00 : f32
    %45 = vector.broadcast %cst_21 : f32 to vector<16x128xf32>
    %46 = arith.select %44, %42, %45 : vector<16x128xi1>, vector<16x128xf32>
    %47 = vector.broadcast %41 : vector<16x1xf32> to vector<16x128xf32>
    %48 = arith.mulf %47, %46 : vector<16x128xf32>
    %c0_22 = arith.constant 0 : index
    %c1_23 = arith.constant 1 : index
    %49 = vector.load %arg7[%c0_22, %c1_23] : memref<16x3xf32, #tpu.memory_space<vmem>>, vector<16x1xf32>
    %50 = vector.broadcast %49 : vector<16x1xf32> to vector<16x128xf32>
    %51 = arith.mulf %50, %39 : vector<16x128xf32>
    %52 = arith.addf %48, %51 : vector<16x128xf32>
    %c0_24 = arith.constant 0 : index
    %c2 = arith.constant 2 : index
    %53 = vector.load %arg7[%c0_24, %c2] : memref<16x3xf32, #tpu.memory_space<vmem>>, vector<16x1xf32>
    %c127_i32 = arith.constant 127 : i32
    %54 = tpu.dynamic_rotate %39 by %c127_i32 dim 1 : vector<16x128xf32>, i32 -> vector<16x128xf32>
    %c127_i32_25 = arith.constant 127 : i32
    %55 = vector.broadcast %c127_i32_25 : i32 to vector<16x128xi32>
    %56 = arith.cmpi slt, %40, %55 : vector<16x128xi32>
    %cst_26 = arith.constant 0.000000e+00 : f32
    %57 = vector.broadcast %cst_26 : f32 to vector<16x128xf32>
    %58 = arith.select %56, %54, %57 : vector<16x128xi1>, vector<16x128xf32>
    %59 = vector.broadcast %53 : vector<16x1xf32> to vector<16x128xf32>
    %60 = arith.mulf %59, %58 : vector<16x128xf32>
    %61 = arith.addf %52, %60 : vector<16x128xf32>
    %c0_27 = arith.constant 0 : index
    %c0_28 = arith.constant 0 : index
    %62 = vector.load %arg8[%c0_27, %c0_28] : memref<16x1xf32, #tpu.memory_space<vmem>>, vector<16x1xf32>
    %63 = vector.broadcast %62 : vector<16x1xf32> to vector<16x128xf32>
    %64 = arith.addf %61, %63 : vector<16x128xf32>
    %cst_29 = arith.constant 0.000000e+00 : f32
    %65 = vector.broadcast %cst_29 : f32 to vector<16x128xf32>
    %66 = arith.cmpf oge, %64, %65 : vector<16x128xf32>
    %67 = vector.broadcast %3 : f32 to vector<16x128xf32>
    %68 = arith.mulf %67, %64 : vector<16x128xf32>
    %69 = arith.select %66, %64, %68 : vector<16x128xi1>, vector<16x128xf32>
    %c0_30 = arith.constant 0 : index
    %c0_31 = arith.constant 0 : index
    %70 = vector.load %arg9[%c0_30, %c0_31] : memref<16x1xf32, #tpu.memory_space<vmem>>, vector<16x1xf32>
    %c0_32 = arith.constant 0 : index
    %c0_33 = arith.constant 0 : index
    %71 = vector.load %arg10[%c0_32, %c0_33] : memref<16x1xf32, #tpu.memory_space<vmem>>, vector<16x1xf32>
    %72 = vector.shape_cast %69 : vector<16x128xf32> to vector<1x16x128xf32>
    %cst_34 = arith.constant dense<0.000000e+00> : vector<1xf32>
    %73 = vector.multi_reduction <add>, %72, %cst_34 [1, 2] : vector<1x16x128xf32> to vector<1xf32>
    %74 = vector.shape_cast %73 : vector<1xf32> to vector<1x1x1xf32>
    %75 = vector.extract %74[0, 0, 0] : f32 from vector<1x1x1xf32>
    %76 = arith.mulf %69, %69 : vector<16x128xf32>
    %77 = vector.shape_cast %76 : vector<16x128xf32> to vector<1x16x128xf32>
    %cst_35 = arith.constant dense<0.000000e+00> : vector<1xf32>
    %78 = vector.multi_reduction <add>, %77, %cst_35 [1, 2] : vector<1x16x128xf32> to vector<1xf32>
    %79 = vector.shape_cast %78 : vector<1xf32> to vector<1x1x1xf32>
    %80 = vector.extract %79[0, 0, 0] : f32 from vector<1x1x1xf32>
    %cst_36 = arith.constant 2.048000e+03 : f32
    %81 = arith.divf %75, %cst_36 : f32
    %cst_37 = arith.constant 2.048000e+03 : f32
    %82 = arith.divf %80, %cst_37 : f32
    %83 = arith.mulf %81, %81 : f32
    %84 = arith.subf %82, %83 : f32
    %cst_38 = arith.constant 0.000000e+00 : f32
    %85 = arith.maximumf %84, %cst_38 : f32
    %86 = vector.broadcast %81 : f32 to vector<16x128xf32>
    %87 = arith.subf %69, %86 : vector<16x128xf32>
    %cst_39 = arith.constant 9.99999993E-9 : f32
    %88 = arith.addf %85, %cst_39 : f32
    %89 = math.rsqrt %88 : f32
    %90 = vector.broadcast %89 : f32 to vector<16x128xf32>
    %91 = arith.mulf %87, %90 : vector<16x128xf32>
    %92 = vector.broadcast %70 : vector<16x1xf32> to vector<16x128xf32>
    %93 = arith.mulf %91, %92 : vector<16x128xf32>
    %94 = vector.broadcast %71 : vector<16x1xf32> to vector<16x128xf32>
    %95 = arith.addf %93, %94 : vector<16x128xf32>
    %c0_40 = arith.constant 0 : index
    %c0_41 = arith.constant 0 : index
    %96 = vector.load %arg11[%c0_40, %c0_41] : memref<8x16xf32, #tpu.memory_space<vmem>>, vector<8x16xf32>
    %cst_42 = arith.constant dense<0.000000e+00> : vector<8x128xf32>
    %97 = tpu.matmul %96, %95, %cst_42 {dimension_numbers = #tpu.dot_dimension_numbers<[1], [0], [0], [1], [0, 0, 1, 1], [], []>} : vector<8x16xf32>, vector<16x128xf32>, vector<8x128xf32> -> vector<8x128xf32>
    %c0_43 = arith.constant 0 : index
    %c0_44 = arith.constant 0 : index
    %98 = vector.load %arg12[%c0_43, %c0_44] : memref<8x1xf32, #tpu.memory_space<vmem>>, vector<8x1xf32>
    %99 = vector.broadcast %98 : vector<8x1xf32> to vector<8x128xf32>
    %100 = arith.addf %97, %99 : vector<8x128xf32>
    %c0_45 = arith.constant 0 : index
    %c0_46 = arith.constant 0 : index
    %c0_47 = arith.constant 0 : index
    %101 = vector.load %arg15[%c0_45, %c0_46, %c0_47] : memref<1x8x128xf32, #tpu.memory_space<vmem>>, vector<1x8x128xf32>
    %102 = vector.shape_cast %101 : vector<1x8x128xf32> to vector<8x128xf32>
    %103 = vector.shape_cast %100 : vector<8x128xf32> to vector<1x8x128xf32>
    tpu.vector_store %arg15[%c0_45, %c0_46, %c0_47], %103 {strides = array<i32>} : memref<1x8x128xf32, #tpu.memory_space<vmem>>, vector<1x8x128xf32>,
    %c0_48 = arith.constant 0 : index
    %c0_49 = arith.constant 0 : index
    %104 = vector.load %arg13[%c0_48, %c0_49] : memref<8x16xf32, #tpu.memory_space<vmem>>, vector<8x16xf32>
    %cst_50 = arith.constant dense<0.000000e+00> : vector<8x128xf32>
    %105 = tpu.matmul %104, %95, %cst_50 {dimension_numbers = #tpu.dot_dimension_numbers<[1], [0], [0], [1], [0, 0, 1, 1], [], []>} : vector<8x16xf32>, vector<16x128xf32>, vector<8x128xf32> -> vector<8x128xf32>
    %c0_51 = arith.constant 0 : index
    %c0_52 = arith.constant 0 : index
    %106 = vector.load %arg14[%c0_51, %c0_52] : memref<8x1xf32, #tpu.memory_space<vmem>>, vector<8x1xf32>
    %107 = vector.broadcast %106 : vector<8x1xf32> to vector<8x128xf32>
    %108 = arith.addf %105, %107 : vector<8x128xf32>
    %c0_53 = arith.constant 0 : index
    %c0_54 = arith.constant 0 : index
    %c0_55 = arith.constant 0 : index
    %109 = vector.load %arg16[%c0_53, %c0_54, %c0_55] : memref<1x8x128xf32, #tpu.memory_space<vmem>>, vector<1x8x128xf32>
    %110 = vector.shape_cast %109 : vector<1x8x128xf32> to vector<8x128xf32>
    %111 = vector.shape_cast %108 : vector<8x128xf32> to vector<1x8x128xf32>
    tpu.vector_store %arg16[%c0_53, %c0_54, %c0_55], %111 {strides = array<i32>} : memref<1x8x128xf32, #tpu.memory_space<vmem>>, vector<1x8x128xf32>,
    return
  }
  func.func @transform_0(%arg0: i32) -> i32 {
    %c0_i32 = arith.constant 0 : i32
    %c0_i32_0 = arith.constant 0 : i32
    return %c0_i32 : i32
  }
  func.func @transform_1(%arg0: i32) -> (i32, i32, i32) {
    %c0_i32 = arith.constant 0 : i32
    %c0_i32_0 = arith.constant 0 : i32
    %c0_i32_1 = arith.constant 0 : i32
    return %arg0, %c0_i32, %c0_i32_0 : i32, i32, i32
  }
  func.func @transform_2(%arg0: i32) -> (i32, i32) {
    %c0_i32 = arith.constant 0 : i32
    %c0_i32_0 = arith.constant 0 : i32
    %c0_i32_1 = arith.constant 0 : i32
    return %c0_i32, %c0_i32_0 : i32, i32
  }
  func.func @transform_3(%arg0: i32) -> (i32, i32) {
    %c0_i32 = arith.constant 0 : i32
    %c0_i32_0 = arith.constant 0 : i32
    %c0_i32_1 = arith.constant 0 : i32
    return %c0_i32, %c0_i32_0 : i32, i32
  }
  func.func @transform_4(%arg0: i32) -> (i32, i32) {
    %c0_i32 = arith.constant 0 : i32
    %c0_i32_0 = arith.constant 0 : i32
    %c0_i32_1 = arith.constant 0 : i32
    return %c0_i32, %c0_i32_0 : i32, i32
  }
  func.func @transform_5(%arg0: i32) -> (i32, i32) {
    %c0_i32 = arith.constant 0 : i32
    %c0_i32_0 = arith.constant 0 : i32
    %c0_i32_1 = arith.constant 0 : i32
    return %c0_i32, %c0_i32_0 : i32, i32
  }
  func.func @transform_6(%arg0: i32) -> (i32, i32) {
    %c0_i32 = arith.constant 0 : i32
    %c0_i32_0 = arith.constant 0 : i32
    %c0_i32_1 = arith.constant 0 : i32
    return %c0_i32, %c0_i32_0 : i32, i32
  }
  func.func @transform_7(%arg0: i32) -> (i32, i32) {
    %c0_i32 = arith.constant 0 : i32
    %c0_i32_0 = arith.constant 0 : i32
    %c0_i32_1 = arith.constant 0 : i32
    return %c0_i32, %c0_i32_0 : i32, i32
  }
  func.func @transform_8(%arg0: i32) -> (i32, i32) {
    %c0_i32 = arith.constant 0 : i32
    %c0_i32_0 = arith.constant 0 : i32
    %c0_i32_1 = arith.constant 0 : i32
    return %c0_i32, %c0_i32_0 : i32, i32
  }
  func.func @transform_9(%arg0: i32) -> (i32, i32) {
    %c0_i32 = arith.constant 0 : i32
    %c0_i32_0 = arith.constant 0 : i32
    %c0_i32_1 = arith.constant 0 : i32
    return %c0_i32, %c0_i32_0 : i32, i32
  }
  func.func @transform_10(%arg0: i32) -> (i32, i32) {
    %c0_i32 = arith.constant 0 : i32
    %c0_i32_0 = arith.constant 0 : i32
    %c0_i32_1 = arith.constant 0 : i32
    return %c0_i32, %c0_i32_0 : i32, i32
  }
  func.func @transform_11(%arg0: i32) -> (i32, i32) {
    %c0_i32 = arith.constant 0 : i32
    %c0_i32_0 = arith.constant 0 : i32
    %c0_i32_1 = arith.constant 0 : i32
    return %c0_i32, %c0_i32_0 : i32, i32
  }
  func.func @transform_12(%arg0: i32) -> (i32, i32) {
    %c0_i32 = arith.constant 0 : i32
    %c0_i32_0 = arith.constant 0 : i32
    %c0_i32_1 = arith.constant 0 : i32
    return %c0_i32, %c0_i32_0 : i32, i32
  }
  func.func @transform_13(%arg0: i32) -> (i32, i32) {
    %c0_i32 = arith.constant 0 : i32
    %c0_i32_0 = arith.constant 0 : i32
    %c0_i32_1 = arith.constant 0 : i32
    return %c0_i32, %c0_i32_0 : i32, i32
  }
  func.func @transform_14(%arg0: i32) -> (i32, i32, i32) {
    %c0_i32 = arith.constant 0 : i32
    %c0_i32_0 = arith.constant 0 : i32
    %c0_i32_1 = arith.constant 0 : i32
    return %arg0, %c0_i32, %c0_i32_0 : i32, i32, i32
  }
  func.func @transform_15(%arg0: i32) -> (i32, i32, i32) {
    %c0_i32 = arith.constant 0 : i32
    %c0_i32_0 = arith.constant 0 : i32
    %c0_i32_1 = arith.constant 0 : i32
    return %arg0, %c0_i32, %c0_i32_0 : i32, i32, i32
  }
}

</mosaic_0001>

<llo_original>
// kernel: depth_conv1d.1
$region0: #{depth_conv1d.1}
  #allocation0 [shape = 'u32[]', space=smem, size = 0x4, offset = 0x4, fixed_abs, tag = 'smem constant byte address 0x4 - core index']
  #allocation1 [shape = 'u32[144,128]{1,0:T(1,128)}', space=vmem, size = 0x12000, scoped, tag = 'internal scratch']
  %s0 = inlined_call_operand.vmem [shape: f32[2], index: 0, kind: input, shape index: {}]
  %s1 = inlined_call_operand.vmem [shape: f32[2,8,128], index: 1, kind: input, shape index: {}]
  %s2 = inlined_call_operand.vmem [shape: f32[16,8], index: 2, kind: input, shape index: {}]
  %s3 = inlined_call_operand.vmem [shape: f32[16,1], index: 3, kind: input, shape index: {}]
  %s4 = inlined_call_operand.vmem [shape: f32[16,1], index: 4, kind: input, shape index: {}]
  %s5 = inlined_call_operand.vmem [shape: f32[16,1], index: 5, kind: input, shape index: {}]
  %s6 = inlined_call_operand.vmem [shape: f32[16,3], index: 6, kind: input, shape index: {}]
  %s7 = inlined_call_operand.vmem [shape: f32[16,1], index: 7, kind: input, shape index: {}]
  %s8 = inlined_call_operand.vmem [shape: f32[16,1], index: 8, kind: input, shape index: {}]
  %s9 = inlined_call_operand.vmem [shape: f32[16,1], index: 9, kind: input, shape index: {}]
  %s10 = inlined_call_operand.vmem [shape: f32[8,16], index: 10, kind: input, shape index: {}]
  %s11 = inlined_call_operand.vmem [shape: f32[8,1], index: 11, kind: input, shape index: {}]
  %s12 = inlined_call_operand.vmem [shape: f32[8,16], index: 12, kind: input, shape index: {}]
  %s13 = inlined_call_operand.vmem [shape: f32[8,1], index: 13, kind: input, shape index: {}]
  %s14 = inlined_call_operand.hbm [shape: f32[2,8,128], index: 14, kind: output, shape index: {0}]
  %s15 = inlined_call_operand.hbm [shape: f32[2,8,128], index: 15, kind: output, shape index: {1}]
  %16 = xla_tuple %s14, %s15
  %s17 = sld [smem:[#allocation0]]
  $region101: #{depth_conv1d.1} parent=0
    _
  %s19 = ssub.s32 1, %s17
  %s20 = scalar_select 0, %s19, %s17
  $region1: #{depth_conv1d.1} parent=0
    #allocation2 [shape = 'u8[512]{0}', space=smem, size = 0x200, scoped, tag = 'input window, operand 0, single buffered']
    #allocation3 [shape = 's32[2]{0}', space=sflag, size = 0x8, scoped, tag = 'scoped memory for depth_conv1d.1']
    #allocation4 [shape = 's32[2]{0}', space=sflag, size = 0x8, scoped, tag = 'scoped memory for depth_conv1d.1']
    #allocation5 [shape = 'u8[8192]{0}', space=vmem, size = 0x2000, scoped, tag = 'output window, operand 0']
    #allocation6 [shape = 'u8[8192]{0}', space=vmem, size = 0x2000, scoped, tag = 'output window, operand 1']
    #allocation7 [shape = 's32[2]{0}', space=sflag, size = 0x8, scoped, tag = 'scoped memory for depth_conv1d.1']
    %21 = vsyncpa [#allocation4], 0
    %22 = vsyncpa [#allocation3], 0
    %s23 = scalar_lea.sflag [#allocation3], 1
    %24 = vsyncpa %s23, 0
    %25 = vsyncpa [#allocation7], 0
    %s26 = scalar_lea.sflag [#allocation7], 1
    %27 = vsyncpa %s26, 0
    loop: start=0, step=1, limit=4
    $region2: #{depth_conv1d.1} parent=1 // loop_pre_header
      _
    $region3: #{depth_conv1d.1} parent=1 // loop_header
      %s29 = sphi 0, %s33
      %p30 = scmp.ge.s32.totalorder %s29, 4
      %s37 = sphi 0, %s37
      %s39 = sphi 0, %s37
      %s40 = sphi 0, %s39
      %s54 = sphi 0, %s40
      %s60 = sphi 0, %s62
      %s63 = sphi 0, %s60
      %s64 = sphi 0, %s63
      %s80 = sphi 0, %s64
      %s84 = sphi 0, %s84
      %s86 = sphi 0, %s84
      %s87 = sphi 0, %s86
      %s101 = sphi 0, %s87
      %s105 = sphi 0, %s105
      %s107 = sphi 0, %s105
      %s108 = sphi 0, %s107
      %s122 = sphi 0, %s108
      %s126 = sphi 0, %s126
      %s128 = sphi 0, %s126
      %s129 = sphi 0, %s128
      %s143 = sphi 0, %s129
      %s147 = sphi 0, %s147
      %s149 = sphi 0, %s147
      %s150 = sphi 0, %s149
      %s164 = sphi 0, %s150
      %s168 = sphi 0, %s168
      %s170 = sphi 0, %s168
      %s171 = sphi 0, %s170
      %s185 = sphi 0, %s171
      %s189 = sphi 0, %s189
      %s191 = sphi 0, %s189
      %s192 = sphi 0, %s191
      %s206 = sphi 0, %s192
      %s210 = sphi 0, %s210
      %s212 = sphi 0, %s210
      %s213 = sphi 0, %s212
      %s227 = sphi 0, %s213
      %s231 = sphi 0, %s231
      %s233 = sphi 0, %s231
      %s234 = sphi 0, %s233
      %s248 = sphi 0, %s234
      %s252 = sphi 0, %s252
      %s254 = sphi 0, %s252
      %s255 = sphi 0, %s254
      %s269 = sphi 0, %s255
      %s273 = sphi 0, %s273
      %s275 = sphi 0, %s273
      %s276 = sphi 0, %s275
      %s290 = sphi 0, %s276
      %s294 = sphi 0, %s294
      %s296 = sphi 0, %s294
      %s297 = sphi 0, %s296
      %s311 = sphi 0, %s297
      %s315 = sphi 0, %s315
      %s317 = sphi 0, %s315
      %s318 = sphi 0, %s317
      %s332 = sphi 0, %s318
      %s338 = sphi 0, %s340
      %s341 = sphi 0, %s338
      %s342 = sphi 0, %s341
      %s358 = sphi 0, %s342
      %s364 = sphi 0, %s366
      %s367 = sphi 0, %s364
      %s368 = sphi 0, %s367
      %s384 = sphi 0, %s368
    $region4: #{depth_conv1d.1} parent=1 // loop_header_branch
      %32 = sbr.rel (%p30) target = $region8
    $region5: #{depth_conv1d.1} parent=1 // loop_body
      %s34 = ssub.s32 %s29, 1
      %s35 = ssub.s32 %s29, 2
      %s36 = sadd.s32 %s29, 1
      %s38 = sadd.s32 %s37, 1
      %p41 = scmp.eq.s32.totalorder %s29, 1
      %p42 = scmp.ne.s32.totalorder %s37, %s39
      %p43 = scmp.eq.s32.totalorder %s29, 0
      %p44 = por %p42, %p43
      %p45 = scmp.ne.s32.totalorder %s37, %s39
      %p46 = scmp.eq.s32.totalorder %s34, 1
      %p47 = por %p45, %p46
      %p48 = scmp.ne.s32.totalorder %s39, %s40
      %p49 = scmp.eq.s32.totalorder %s34, 0
      %p50 = por %p48, %p49
      %p51 = scmp.ne.s32.totalorder %s39, %s40
      %p52 = scmp.eq.s32.totalorder %s35, 1
      %p53 = por %p51, %p52
      %p55 = scmp.ne.s32.totalorder %s40, %s54
      %p56 = scmp.eq.s32.totalorder %s35, 0
      %p57 = por %p55, %p56
      %s58 = ssub.s32 %s29, %s36
      %p59 = scmp.eq.s32.totalorder %s58, 0
      %s61 = sadd.s32 %s60, 1
      %s62 = scalar_select %p59, %s60, %s61
      %p65 = pneg %p59
      %p66 = scmp.eq.s32.totalorder %s29, 1
      %p67 = por %p65, %p66
      %p68 = scmp.ne.s32.totalorder %s60, %s63
      %p69 = scmp.eq.s32.totalorder %s29, 0
      %p70 = por %p68, %p69
      %p71 = scmp.ne.s32.totalorder %s60, %s63
      %p72 = scmp.eq.s32.totalorder %s34, 1
      %p73 = por %p71, %p72
      %p74 = scmp.ne.s32.totalorder %s63, %s64
      %p75 = scmp.eq.s32.totalorder %s34, 0
      %p76 = por %p74, %p75
      %p77 = scmp.ne.s32.totalorder %s63, %s64
      %p78 = scmp.eq.s32.totalorder %s35, 1
      %p79 = por %p77, %p78
      %p81 = scmp.ne.s32.totalorder %s64, %s80
      %p82 = scmp.eq.s32.totalorder %s35, 0
      %p83 = por %p81, %p82
      %s85 = sadd.s32 %s84, 1
      %p88 = scmp.eq.s32.totalorder %s29, 1
      %p89 = scmp.ne.s32.totalorder %s84, %s86
      %p90 = scmp.eq.s32.totalorder %s29, 0
      %p91 = por %p89, %p90
      %p92 = scmp.ne.s32.totalorder %s84, %s86
      %p93 = scmp.eq.s32.totalorder %s34, 1
      %p94 = por %p92, %p93
      %p95 = scmp.ne.s32.totalorder %s86, %s87
      %p96 = scmp.eq.s32.totalorder %s34, 0
      %p97 = por %p95, %p96
      %p98 = scmp.ne.s32.totalorder %s86, %s87
      %p99 = scmp.eq.s32.totalorder %s35, 1
      %p100 = por %p98, %p99
      %p102 = scmp.ne.s32.totalorder %s87, %s101
      %p103 = scmp.eq.s32.totalorder %s35, 0
      %p104 = por %p102, %p103
      %s106 = sadd.s32 %s105, 1
      %p109 = scmp.eq.s32.totalorder %s29, 1
      %p110 = scmp.ne.s32.totalorder %s105, %s107
      %p111 = scmp.eq.s32.totalorder %s29, 0
      %p112 = por %p110, %p111
      %p113 = scmp.ne.s32.totalorder %s105, %s107
      %p114 = scmp.eq.s32.totalorder %s34, 1
      %p115 = por %p113, %p114
      %p116 = scmp.ne.s32.totalorder %s107, %s108
      %p117 = scmp.eq.s32.totalorder %s34, 0
      %p118 = por %p116, %p117
      %p119 = scmp.ne.s32.totalorder %s107, %s108
      %p120 = scmp.eq.s32.totalorder %s35, 1
      %p121 = por %p119, %p120
      %p123 = scmp.ne.s32.totalorder %s108, %s122
      %p124 = scmp.eq.s32.totalorder %s35, 0
      %p125 = por %p123, %p124
      %s127 = sadd.s32 %s126, 1
      %p130 = scmp.eq.s32.totalorder %s29, 1
      %p131 = scmp.ne.s32.totalorder %s126, %s128
      %p132 = scmp.eq.s32.totalorder %s29, 0
      %p133 = por %p131, %p132
      %p134 = scmp.ne.s32.totalorder %s126, %s128
      %p135 = scmp.eq.s32.totalorder %s34, 1
      %p136 = por %p134, %p135
      %p137 = scmp.ne.s32.totalorder %s128, %s129
      %p138 = scmp.eq.s32.totalorder %s34, 0
      %p139 = por %p137, %p138
      %p140 = scmp.ne.s32.totalorder %s128, %s129
      %p141 = scmp.eq.s32.totalorder %s35, 1
      %p142 = por %p140, %p141
      %p144 = scmp.ne.s32.totalorder %s129, %s143
      %p145 = scmp.eq.s32.totalorder %s35, 0
      %p146 = por %p144, %p145
      %s148 = sadd.s32 %s147, 1
      %p151 = scmp.eq.s32.totalorder %s29, 1
      %p152 = scmp.ne.s32.totalorder %s147, %s149
      %p153 = scmp.eq.s32.totalorder %s29, 0
      %p154 = por %p152, %p153
      %p155 = scmp.ne.s32.totalorder %s147, %s149
      %p156 = scmp.eq.s32.totalorder %s34, 1
      %p157 = por %p155, %p156
      %p158 = scmp.ne.s32.totalorder %s149, %s150
      %p159 = scmp.eq.s32.totalorder %s34, 0
      %p160 = por %p158, %p159
      %p161 = scmp.ne.s32.totalorder %s149, %s150
      %p162 = scmp.eq.s32.totalorder %s35, 1
      %p163 = por %p161, %p162
      %p165 = scmp.ne.s32.totalorder %s150, %s164
      %p166 = scmp.eq.s32.totalorder %s35, 0
      %p167 = por %p165, %p166
      %s169 = sadd.s32 %s168, 1
      %p172 = scmp.eq.s32.totalorder %s29, 1
      %p173 = scmp.ne.s32.totalorder %s168, %s170
      %p174 = scmp.eq.s32.totalorder %s29, 0
      %p175 = por %p173, %p174
      %p176 = scmp.ne.s32.totalorder %s168, %s170
      %p177 = scmp.eq.s32.totalorder %s34, 1
      %p178 = por %p176, %p177
      %p179 = scmp.ne.s32.totalorder %s170, %s171
      %p180 = scmp.eq.s32.totalorder %s34, 0
      %p181 = por %p179, %p180
      %p182 = scmp.ne.s32.totalorder %s170, %s171
      %p183 = scmp.eq.s32.totalorder %s35, 1
      %p184 = por %p182, %p183
      %p186 = scmp.ne.s32.totalorder %s171, %s185
      %p187 = scmp.eq.s32.totalorder %s35, 0
      %p188 = por %p186, %p187
      %s190 = sadd.s32 %s189, 1
      %p193 = scmp.eq.s32.totalorder %s29, 1
      %p194 = scmp.ne.s32.totalorder %s189, %s191
      %p195 = scmp.eq.s32.totalorder %s29, 0
      %p196 = por %p194, %p195
      %p197 = scmp.ne.s32.totalorder %s189, %s191
      %p198 = scmp.eq.s32.totalorder %s34, 1
      %p199 = por %p197, %p198
      %p200 = scmp.ne.s32.totalorder %s191, %s192
      %p201 = scmp.eq.s32.totalorder %s34, 0
      %p202 = por %p200, %p201
      %p203 = scmp.ne.s32.totalorder %s191, %s192
      %p204 = scmp.eq.s32.totalorder %s35, 1
      %p205 = por %p203, %p204
      %p207 = scmp.ne.s32.totalorder %s192, %s206
      %p208 = scmp.eq.s32.totalorder %s35, 0
      %p209 = por %p207, %p208
      %s211 = sadd.s32 %s210, 1
      %p214 = scmp.eq.s32.totalorder %s29, 1
      %p215 = scmp.ne.s32.totalorder %s210, %s212
      %p216 = scmp.eq.s32.totalorder %s29, 0
      %p217 = por %p215, %p216
      %p218 = scmp.ne.s32.totalorder %s210, %s212
      %p219 = scmp.eq.s32.totalorder %s34, 1
      %p220 = por %p218, %p219
      %p221 = scmp.ne.s32.totalorder %s212, %s213
      %p222 = scmp.eq.s32.totalorder %s34, 0
      %p223 = por %p221, %p222
      %p224 = scmp.ne.s32.totalorder %s212, %s213
      %p225 = scmp.eq.s32.totalorder %s35, 1
      %p226 = por %p224, %p225
      %p228 = scmp.ne.s32.totalorder %s213, %s227
      %p229 = scmp.eq.s32.totalorder %s35, 0
      %p230 = por %p228, %p229
      %s232 = sadd.s32 %s231, 1
      %p235 = scmp.eq.s32.totalorder %s29, 1
      %p236 = scmp.ne.s32.totalorder %s231, %s233
      %p237 = scmp.eq.s32.totalorder %s29, 0
      %p238 = por %p236, %p237
      %p239 = scmp.ne.s32.totalorder %s231, %s233
      %p240 = scmp.eq.s32.totalorder %s34, 1
      %p241 = por %p239, %p240
      %p242 = scmp.ne.s32.totalorder %s233, %s234
      %p243 = scmp.eq.s32.totalorder %s34, 0
      %p244 = por %p242, %p243
      %p245 = scmp.ne.s32.totalorder %s233, %s234
      %p246 = scmp.eq.s32.totalorder %s35, 1
      %p247 = por %p245, %p246
      %p249 = scmp.ne.s32.totalorder %s234, %s248
      %p250 = scmp.eq.s32.totalorder %s35, 0
      %p251 = por %p249, %p250
      %s253 = sadd.s32 %s252, 1
      %p256 = scmp.eq.s32.totalorder %s29, 1
      %p257 = scmp.ne.s32.totalorder %s252, %s254
      %p258 = scmp.eq.s32.totalorder %s29, 0
      %p259 = por %p257, %p258
      %p260 = scmp.ne.s32.totalorder %s252, %s254
      %p261 = scmp.eq.s32.totalorder %s34, 1
      %p262 = por %p260, %p261
      %p263 = scmp.ne.s32.totalorder %s254, %s255
      %p264 = scmp.eq.s32.totalorder %s34, 0
      %p265 = por %p263, %p264
      %p266 = scmp.ne.s32.totalorder %s254, %s255
      %p267 = scmp.eq.s32.totalorder %s35, 1
      %p268 = por %p266, %p267
      %p270 = scmp.ne.s32.totalorder %s255, %s269
      %p271 = scmp.eq.s32.totalorder %s35, 0
      %p272 = por %p270, %p271
      %s274 = sadd.s32 %s273, 1
      %p277 = scmp.eq.s32.totalorder %s29, 1
      %p278 = scmp.ne.s32.totalorder %s273, %s275
      %p279 = scmp.eq.s32.totalorder %s29, 0
      %p280 = por %p278, %p279
      %p281 = scmp.ne.s32.totalorder %s273, %s275
      %p282 = scmp.eq.s32.totalorder %s34, 1
      %p283 = por %p281, %p282
      %p284 = scmp.ne.s32.totalorder %s275, %s276
      %p285 = scmp.eq.s32.totalorder %s34, 0
      %p286 = por %p284, %p285
      %p287 = scmp.ne.s32.totalorder %s275, %s276
      %p288 = scmp.eq.s32.totalorder %s35, 1
      %p289 = por %p287, %p288
      %p291 = scmp.ne.s32.totalorder %s276, %s290
      %p292 = scmp.eq.s32.totalorder %s35, 0
      %p293 = por %p291, %p292
      %s295 = sadd.s32 %s294, 1
      %p298 = scmp.eq.s32.totalorder %s29, 1
      %p299 = scmp.ne.s32.totalorder %s294, %s296
      %p300 = scmp.eq.s32.totalorder %s29, 0
      %p301 = por %p299, %p300
      %p302 = scmp.ne.s32.totalorder %s294, %s296
      %p303 = scmp.eq.s32.totalorder %s34, 1
      %p304 = por %p302, %p303
      %p305 = scmp.ne.s32.totalorder %s296, %s297
      %p306 = scmp.eq.s32.totalorder %s34, 0
      %p307 = por %p305, %p306
      %p308 = scmp.ne.s32.totalorder %s296, %s297
      %p309 = scmp.eq.s32.totalorder %s35, 1
      %p310 = por %p308, %p309
      %p312 = scmp.ne.s32.totalorder %s297, %s311
      %p313 = scmp.eq.s32.totalorder %s35, 0
      %p314 = por %p312, %p313
      %s316 = sadd.s32 %s315, 1
      %p319 = scmp.eq.s32.totalorder %s29, 1
      %p320 = scmp.ne.s32.totalorder %s315, %s317
      %p321 = scmp.eq.s32.totalorder %s29, 0
      %p322 = por %p320, %p321
      %p323 = scmp.ne.s32.totalorder %s315, %s317
      %p324 = scmp.eq.s32.totalorder %s34, 1
      %p325 = por %p323, %p324
      %p326 = scmp.ne.s32.totalorder %s317, %s318
      %p327 = scmp.eq.s32.totalorder %s34, 0
      %p328 = por %p326, %p327
      %p329 = scmp.ne.s32.totalorder %s317, %s318
      %p330 = scmp.eq.s32.totalorder %s35, 1
      %p331 = por %p329, %p330
      %p333 = scmp.ne.s32.totalorder %s318, %s332
      %p334 = scmp.eq.s32.totalorder %s35, 0
      %p335 = por %p333, %p334
      %s336 = ssub.s32 %s29, %s36
      %p337 = scmp.eq.s32.totalorder %s336, 0
      %s339 = sadd.s32 %s338, 1
      %s340 = scalar_select %p337, %s338, %s339
      %p343 = pneg %p337
      %p344 = scmp.eq.s32.totalorder %s29, 1
      %p345 = por %p343, %p344
      %p346 = scmp.ne.s32.totalorder %s338, %s341
      %p347 = scmp.eq.s32.totalorder %s29, 0
      %p348 = por %p346, %p347
      %p349 = scmp.ne.s32.totalorder %s338, %s341
      %p350 = scmp.eq.s32.totalorder %s34, 1
      %p351 = por %p349, %p350
      %p352 = scmp.ne.s32.totalorder %s341, %s342
      %p353 = scmp.eq.s32.totalorder %s34, 0
      %p354 = por %p352, %p353
      %p355 = scmp.ne.s32.totalorder %s341, %s342
      %p356 = scmp.eq.s32.totalorder %s35, 1
      %p357 = por %p355, %p356
      %p359 = scmp.ne.s32.totalorder %s342, %s358
      %p360 = scmp.eq.s32.totalorder %s35, 0
      %p361 = por %p359, %p360
      %s362 = ssub.s32 %s29, %s36
      %p363 = scmp.eq.s32.totalorder %s362, 0
      %s365 = sadd.s32 %s364, 1
      %s366 = scalar_select %p363, %s364, %s365
      %p369 = pneg %p363
      %p370 = scmp.eq.s32.totalorder %s29, 1
      %p371 = por %p369, %p370
      %p372 = scmp.ne.s32.totalorder %s364, %s367
      %p373 = scmp.eq.s32.totalorder %s29, 0
      %p374 = por %p372, %p373
      %p375 = scmp.ne.s32.totalorder %s364, %s367
      %p376 = scmp.eq.s32.totalorder %s34, 1
      %p377 = por %p375, %p376
      %p378 = scmp.ne.s32.totalorder %s367, %s368
      %p379 = scmp.eq.s32.totalorder %s34, 0
      %p380 = por %p378, %p379
      %p381 = scmp.ne.s32.totalorder %s367, %s368
      %p382 = scmp.eq.s32.totalorder %s35, 1
      %p383 = por %p381, %p382
      %p385 = scmp.ne.s32.totalorder %s368, %s384
      %p386 = scmp.eq.s32.totalorder %s35, 0
      %p387 = por %p385, %p386
      %p388 = scmp.le.s32.totalorder 1, %s29
      %p389 = scmp.lt.s32.totalorder %s29, 3
      %p390 = pnand %p388, %p389
      %p391 = pneg %p390
      // Predicated region
      $region9: #{depth_conv1d.1} parent=5 // pred_check
        _
      $region10: #{depth_conv1d.1} parent=5 // pred_check_branch
        %393 = sbr.rel (%p390) target = $region12
      $region11: #{depth_conv1d.1} parent=5 // pred_region
        %s394 = ssub.s32 %s29, 1
        // Predicated region
        $region13: #{depth_conv1d.1} parent=11 // pred_check
          %p395 = pneg %p50
        $region14: #{depth_conv1d.1} parent=11 // pred_check_branch
          %397 = sbr.rel (%p395) target = $region16
        $region15: #{depth_conv1d.1} parent=11 // pred_region
          %s399 = ssub.s32 16, 16
          %400 = vsyncadd [#allocation4], %s399
          %s402 = sshll.u32 %s0, 4
          %s403 = int_to_ptr.vmem [resolvable:$true] %s402
          %405 = dma.vmem_to_smem %s403, 16, [#allocation2], [#allocation4]
        $region16: #{depth_conv1d.1} parent=11 // pred_fallthru
          _
        // Predicated region
        $region17: #{depth_conv1d.1} parent=11 // pred_check
          %p406 = pneg %p97
        $region18: #{depth_conv1d.1} parent=11 // pred_check_branch
          %408 = sbr.rel (%p406) target = $region20
        $region19: #{depth_conv1d.1} parent=11 // pred_region
          _
        $region20: #{depth_conv1d.1} parent=11 // pred_fallthru
          _
        // Predicated region
        $region21: #{depth_conv1d.1} parent=11 // pred_check
          %p409 = pneg %p118
        $region22: #{depth_conv1d.1} parent=11 // pred_check_branch
          %411 = sbr.rel (%p409) target = $region24
        $region23: #{depth_conv1d.1} parent=11 // pred_region
          _
        $region24: #{depth_conv1d.1} parent=11 // pred_fallthru
          _
        // Predicated region
        $region25: #{depth_conv1d.1} parent=11 // pred_check
          %p412 = pneg %p139
        $region26: #{depth_conv1d.1} parent=11 // pred_check_branch
          %414 = sbr.rel (%p412) target = $region28
        $region27: #{depth_conv1d.1} parent=11 // pred_region
          _
        $region28: #{depth_conv1d.1} parent=11 // pred_fallthru
          _
        // Predicated region
        $region29: #{depth_conv1d.1} parent=11 // pred_check
          %p415 = pneg %p160
        $region30: #{depth_conv1d.1} parent=11 // pred_check_branch
          %417 = sbr.rel (%p415) target = $region32
        $region31: #{depth_conv1d.1} parent=11 // pred_region
          _
        $region32: #{depth_conv1d.1} parent=11 // pred_fallthru
          _
        // Predicated region
        $region33: #{depth_conv1d.1} parent=11 // pred_check
          %p418 = pneg %p181
        $region34: #{depth_conv1d.1} parent=11 // pred_check_branch
          %420 = sbr.rel (%p418) target = $region36
        $region35: #{depth_conv1d.1} parent=11 // pred_region
          _
        $region36: #{depth_conv1d.1} parent=11 // pred_fallthru
          _
        // Predicated region
        $region37: #{depth_conv1d.1} parent=11 // pred_check
          %p421 = pneg %p202
        $region38: #{depth_conv1d.1} parent=11 // pred_check_branch
          %423 = sbr.rel (%p421) target = $region40
        $region39: #{depth_conv1d.1} parent=11 // pred_region
          _
        $region40: #{depth_conv1d.1} parent=11 // pred_fallthru
          _
        // Predicated region
        $region41: #{depth_conv1d.1} parent=11 // pred_check
          %p424 = pneg %p223
        $region42: #{depth_conv1d.1} parent=11 // pred_check_branch
          %426 = sbr.rel (%p424) target = $region44
        $region43: #{depth_conv1d.1} parent=11 // pred_region
          _
        $region44: #{depth_conv1d.1} parent=11 // pred_fallthru
          _
        // Predicated region
        $region45: #{depth_conv1d.1} parent=11 // pred_check
          %p427 = pneg %p244
        $region46: #{depth_conv1d.1} parent=11 // pred_check_branch
          %429 = sbr.rel (%p427) target = $region48
        $region47: #{depth_conv1d.1} parent=11 // pred_region
          _
        $region48: #{depth_conv1d.1} parent=11 // pred_fallthru
          _
        // Predicated region
        $region49: #{depth_conv1d.1} parent=11 // pred_check
          %p430 = pneg %p265
        $region50: #{depth_conv1d.1} parent=11 // pred_check_branch
          %432 = sbr.rel (%p430) target = $region52
        $region51: #{depth_conv1d.1} parent=11 // pred_region
          _
        $region52: #{depth_conv1d.1} parent=11 // pred_fallthru
          _
        // Predicated region
        $region53: #{depth_conv1d.1} parent=11 // pred_check
          %p433 = pneg %p286
        $region54: #{depth_conv1d.1} parent=11 // pred_check_branch
          %435 = sbr.rel (%p433) target = $region56
        $region55: #{depth_conv1d.1} parent=11 // pred_region
          _
        $region56: #{depth_conv1d.1} parent=11 // pred_fallthru
          _
        // Predicated region
        $region57: #{depth_conv1d.1} parent=11 // pred_check
          %p436 = pneg %p307
        $region58: #{depth_conv1d.1} parent=11 // pred_check_branch
          %438 = sbr.rel (%p436) target = $region60
        $region59: #{depth_conv1d.1} parent=11 // pred_region
          _
        $region60: #{depth_conv1d.1} parent=11 // pred_fallthru
          _
        // Predicated region
        $region61: #{depth_conv1d.1} parent=11 // pred_check
          %p439 = pneg %p328
        $region62: #{depth_conv1d.1} parent=11 // pred_check_branch
          %441 = sbr.rel (%p439) target = $region64
        $region63: #{depth_conv1d.1} parent=11 // pred_region
          _
        $region64: #{depth_conv1d.1} parent=11 // pred_fallthru
          _
      $region12: #{depth_conv1d.1} parent=5 // pred_fallthru
        _
      %p442 = scmp.lt.s32.totalorder %s29, 2
      // Predicated region
      $region65: #{depth_conv1d.1} parent=5 // pred_check
        %p443 = pneg %p442
      $region66: #{depth_conv1d.1} parent=5 // pred_check_branch
        %445 = sbr.rel (%p443) target = $region68
      $region67: #{depth_conv1d.1} parent=5 // pred_region
        // Predicated region
        $region69: #{depth_conv1d.1} parent=67 // pred_check
          %p446 = pneg %p70
        $region70: #{depth_conv1d.1} parent=67 // pred_check_branch
          %448 = sbr.rel (%p446) target = $region72
        $region71: #{depth_conv1d.1} parent=67 // pred_region
          %p449 = scmp.lt.s32.totalorder %s29, 1
          %s450 = scalar_select %p449, %s29, 1
          %s451 = smul.addr %s450, 8
          %s452 = scalar_lea.vmem %s1, %s451
        $region72: #{depth_conv1d.1} parent=67 // pred_fallthru
          _
      $region68: #{depth_conv1d.1} parent=5 // pred_fallthru
        _
      %p453 = scmp.le.s32.totalorder 1, %s29
      %p454 = scmp.lt.s32.totalorder %s29, 3
      %p455 = pnand %p453, %p454
      %p456 = pneg %p455
      // Predicated region
      $region73: #{depth_conv1d.1} parent=5 // pred_check
        _
      $region74: #{depth_conv1d.1} parent=5 // pred_check_branch
        %458 = sbr.rel (%p455) target = $region76
      $region75: #{depth_conv1d.1} parent=5 // pred_region
        %s459 = ssub.s32 %s29, 1
        // Predicated region
        $region77: #{depth_conv1d.1} parent=75 // pred_check
          %p460 = pneg %p50
        $region78: #{depth_conv1d.1} parent=75 // pred_check_branch
          %462 = sbr.rel (%p460) target = $region80
        $region79: #{depth_conv1d.1} parent=75 // pred_region
          %463 = dma.done [#allocation4], 16
        $region80: #{depth_conv1d.1} parent=75 // pred_fallthru
          _
        %464 = sfence
        %p465 = pneg %p50
        %p466 = pneg %p47
        %p467 = scmp.lt.s32.totalorder %s34, 1
        %s468 = scalar_select %p467, %s34, 1
        %s469 = smul.addr %s468, 8
        %s470 = scalar_lea.vmem %s1, %s469
        %p471 = pneg %p76
        %p472 = pneg %p73
        %p473 = pneg %p97
        %p474 = pneg %p94
        %p475 = pneg %p118
        %p476 = pneg %p115
        %p477 = pneg %p139
        %p478 = pneg %p136
        %p479 = pneg %p160
        %p480 = pneg %p157
        %p481 = pneg %p181
        %p482 = pneg %p178
        %p483 = pneg %p202
        %p484 = pneg %p199
        %p485 = pneg %p223
        %p486 = pneg %p220
        %p487 = pneg %p244
        %p488 = pneg %p241
        %p489 = pneg %p265
        %p490 = pneg %p262
        %p491 = pneg %p286
        %p492 = pneg %p283
        %p493 = pneg %p307
        %p494 = pneg %p304
        %p495 = pneg %p328
        %p496 = pneg %p325
        %p497 = pneg %p354
        %p498 = pneg %p351
        %s499 = sand.u32 %s341, 1
        %s500 = scalar_lea.sflag [#allocation3], %s499
        %s501 = sand.u32 %s341, 1
        %s502 = smul.addr %s501, 8
        %s503 = scalar_lea.vmem [#allocation5], %s502
        %p504 = pneg %p380
        %p505 = pneg %p377
        %s506 = sand.u32 %s367, 1
        %s507 = scalar_lea.sflag [#allocation7], %s506
        %s508 = sand.u32 %s367, 1
        %s509 = smul.addr %s508, 8
        %s510 = scalar_lea.vmem [#allocation6], %s509
        %p511 = scmp.lt.s32.totalorder %s34, 1
        %s512 = scalar_select %p511, %s34, 1
        %s513 = smul.addr %s512, 8
        %s514 = scalar_lea.vmem %s1, %s513
        %v515 = vld [vmem:[%s514] sm:$0xff]
        %s516 = sld [smem:[#allocation2]]
        %s517 = sld [smem:[#allocation2 + $0x1]]
        %v518 = vld [vmem:[%s2] sm:$0xff]
        %v519 = vld [vmem:[%s2 + $0x8] sm:$0xff]
        %v520 = vld [vmem:[%s3] sm:$0xff]
        %v521 = vld [vmem:[%s3 + $0x8] sm:$0xff]
        %523 = vset.pattern.permute.xlu0 0
        %524 = vperm.xlu0 %523, %v520
        %v525 = vpop.permute.xlu0 %524
        %528 = vset.pattern.permute.xlu0 0
        %529 = vperm.xlu0 %528, %v521
        %v530 = vpop.permute.xlu0 %529
        %vm532 = vcmask 64512
        %v534 = vsel %vm532, %v518, 0
        %v537 = vsel %vm532, %v519, 0
        %539 = vmatprep.subr.mxu0 0.0
        %540 = vmatpush1.msra.mxu0 0.0
        %541 = vmatprep.subr.mxu0 0.0
        %542 = vmatpush1.msra.mxu0 0.0
        %543 = vmatprep.subr.mxu0 0.0
        %544 = vmatpush1.msra.mxu0 0.0
        %545 = vmatprep.subr.mxu0 0.0
        %546 = vmatpush1.msra.mxu0 0.0
        %547 = vmatprep.subr.mxu0 0.0
        %548 = vmatpush1.msra.mxu0 0.0
        %549 = vmatprep.subr.mxu0 0.0
        %550 = vmatpush1.msra.mxu0 0.0
        %551 = vmatprep.subr.mxu0 0.0
        %552 = vmatpush1.msra.mxu0 0.0
        %553 = vmatprep.subr.mxu0 0.0
        %554 = vmatpush1.msra.mxu0 0.0
        %555 = vmatprep.subr.mxu0 0.0
        %556 = vmatpush1.msra.mxu0 0.0
        %557 = vmatprep.subr.mxu0 0.0
        %558 = vmatpush1.msra.mxu0 0.0
        %559 = vmatprep.subr.mxu0 0.0
        %560 = vmatpush1.msra.mxu0 0.0
        %561 = vmatprep.subr.mxu0 0.0
        %562 = vmatpush1.msra.mxu0 0.0
        %563 = vmatprep.subr.mxu0 0.0
        %564 = vmatpush1.msra.mxu0 0.0
        %565 = vmatprep.subr.mxu0 0.0
        %566 = vmatpush1.msra.mxu0 0.0
        %567 = vmatprep.subr.mxu0 0.0
        %568 = vmatpush1.msra.mxu0 0.0
        %569 = vmatprep.subr.mxu0 0.0
        %570 = vmatpush1.msra.mxu0 %v515
        %571 = vmatprep.subr.mxu0 0.0
        %572 = vmatpush2.msra.mxu0 0.0
        %573 = vmatprep.subr.mxu0 0.0
        %574 = vmatpush2.msra.mxu0 0.0
        %575 = vmatprep.subr.mxu0 0.0
        %576 = vmatpush2.msra.mxu0 0.0
        %577 = vmatprep.subr.mxu0 0.0
        %578 = vmatpush2.msra.mxu0 0.0
        %579 = vmatprep.subr.mxu0 0.0
        %580 = vmatpush2.msra.mxu0 0.0
        %581 = vmatprep.subr.mxu0 0.0
        %582 = vmatpush2.msra.mxu0 0.0
        %583 = vmatprep.subr.mxu0 0.0
        %584 = vmatpush2.msra.mxu0 0.0
        %585 = vmatprep.subr.mxu0 0.0
        %586 = vmatpush2.msra.mxu0 0.0
        %587 = vmatprep.subr.mxu0 0.0
        %588 = vmatpush2.msra.mxu0 0.0
        %589 = vmatprep.subr.mxu0 0.0
        %590 = vmatpush2.msra.mxu0 0.0
        %591 = vmatprep.subr.mxu0 0.0
        %592 = vmatpush2.msra.mxu0 0.0
        %593 = vmatprep.subr.mxu0 0.0
        %594 = vmatpush2.msra.mxu0 0.0
        %595 = vmatprep.subr.mxu0 0.0
        %596 = vmatpush2.msra.mxu0 0.0
        %597 = vmatprep.subr.mxu0 0.0
        %598 = vmatpush2.msra.mxu0 0.0
        %599 = vmatprep.subr.mxu0 0.0
        %600 = vmatpush2.msra.mxu0 0.0
        %601 = vmatprep.subr.mxu0 0.0
        %602 = vmatpush2.msra.mxu0 0.0
        %603 = vmatprep.mubr.f32.mxu0 0.0
        %604 = vmatmul.mubr.f32.gmra.mxu0 %v534
        %v605 = vpop.f32.mrf.mxu0
        %v606 = vadd.f32 %v525, %v605
        %v607 = vpop.f32.mrf.mxu0
        %608 = vmatprep.mubr.f32.mxu0 0.0
        %609 = vmatmul.mubr.f32.gmra.mxu0 %v537
        %v610 = vpop.f32.mrf.mxu0
        %v611 = vadd.f32 %v530, %v610
        %v612 = vpop.f32.mrf.mxu0
        %613 = vdwg.mxu0
        %vm614 = vcmp.ge.f32.partialorder %v606, 0.0
        %vm615 = vcmp.ge.f32.partialorder %v611, 0.0
        %v616 = vstv %s516
        %v617 = vmul.f32 %v616, %v606
        %v618 = vmul.f32 %v616, %v611
        %v619 = vsel %vm614, %v606, %v617
        %v620 = vsel %vm615, %v611, %v618
        %v621 = vld [vmem:[%s4] sm:$0xff]
        %v622 = vld [vmem:[%s4 + $0x8] sm:$0xff]
        %v623 = vld [vmem:[%s5] sm:$0xff]
        %v624 = vld [vmem:[%s5 + $0x8] sm:$0xff]
        %v625 = vadd.f32 %v619, %v620
        %626 = vadd.xlane.f32.xlu0 %v625
        %v627 = vpop.xlane.xlu0 %626
        %v628 = vrot.slane %v627, 4
        %v629 = vadd.f32 %v627, %v628
        %v630 = vrot.slane %v629, 2
        %v631 = vadd.f32 %v629, %v630
        %v632 = vrot.slane %v631, 1
        %v633 = vadd.f32 %v631, %v632
        %s634 = vtos %v633
        %v635 = vmul.f32 %v619, %v619
        %v636 = vmul.f32 %v620, %v620
        %v637 = vadd.f32 %v635, %v636
        %638 = vadd.xlane.f32.xlu0 %v637
        %v639 = vpop.xlane.xlu0 %638
        %v640 = vrot.slane %v639, 4
        %v641 = vadd.f32 %v639, %v640
        %v642 = vrot.slane %v641, 2
        %v643 = vadd.f32 %v641, %v642
        %v644 = vrot.slane %v643, 1
        %v645 = vadd.f32 %v643, %v644
        %s646 = vtos %v645
        %v647 = vrcp.pop 2048.0
        %s648 = vtos %v647
        %s649 = smul.f32 %s634, %s648
        %v650 = vrcp.pop 2048.0
        %s651 = vtos %v650
        %s652 = smul.f32 %s646, %s651
        %s653 = smul.f32 %s649, %s649
        %s654 = ssub.f32 %s652, %s653
        %s655 = smax.f32 %s654, 0.0
        %v656 = vstv %s649
        %v657 = vsub.f32 %v619, %v656
        %v658 = vsub.f32 %v620, %v656
        %s659 = sadd.f32 %s655, 1e-08
        %v660 = vstv %s659
        %v661 = vrsqrt.pop %v660
        %s662 = vtos %v661
        %v663 = vstv %s662
        %v664 = vmul.f32 %v657, %v663
        %v665 = vmul.f32 %v658, %v663
        %667 = vset.pattern.permute.xlu0 0
        %668 = vperm.xlu0 %667, %v621
        %v669 = vpop.permute.xlu0 %668
        %672 = vset.pattern.permute.xlu0 0
        %673 = vperm.xlu0 %672, %v622
        %v674 = vpop.permute.xlu0 %673
        %v676 = vmul.f32 %v664, %v669
        %v677 = vmul.f32 %v665, %v674
        %679 = vset.pattern.permute.xlu0 0
        %680 = vperm.xlu0 %679, %v623
        %v681 = vpop.permute.xlu0 %680
        %684 = vset.pattern.permute.xlu0 0
        %685 = vperm.xlu0 %684, %v624
        %v686 = vpop.permute.xlu0 %685
        %v688 = vadd.f32 %v676, %v681
        %v689 = vadd.f32 %v677, %v686
        %v690 = vlaneseq
        %v691 = vand.u32 %v690, 127
        %v692 = vld [vmem:[%s6] sm:$0xff]
        %v693 = vld [vmem:[%s6 + $0x8] sm:$0xff]
        %694 = vrot.lane.b32.xlu0 %v688, 1
        %v695 = vpop.permute.xlu0 %694
        %696 = vrot.lane.b32.xlu0 %v689, 1
        %v697 = vpop.permute.xlu0 %696
        %vm698 = vcmp.ge.s32.totalorder %v691, 1
        %v699 = vsel %vm698, %v695, 0.0
        %v700 = vsel %vm698, %v697, 0.0
        %702 = vset.pattern.permute.xlu0 0
        %703 = vperm.xlu0 %702, %v692
        %v704 = vpop.permute.xlu0 %703
        %707 = vset.pattern.permute.xlu0 0
        %708 = vperm.xlu0 %707, %v693
        %v709 = vpop.permute.xlu0 %708
        %v711 = vmul.f32 %v704, %v699
        %v712 = vmul.f32 %v709, %v700
        %713 = vset.pattern.permute.xlu0 1
        %714 = vperm.xlu0 %713, %v692
        %v715 = vpop.permute.xlu0 %714
        %717 = vset.pattern.permute.xlu0 1
        %718 = vperm.xlu0 %717, %v693
        %v719 = vpop.permute.xlu0 %718
        %v721 = vmul.f32 %v715, %v688
        %v722 = vmul.f32 %v719, %v689
        %v723 = vadd.f32 %v711, %v721
        %v724 = vadd.f32 %v712, %v722
        %725 = vrot.lane.b32.xlu0 %v688, 127
        %v726 = vpop.permute.xlu0 %725
        %727 = vrot.lane.b32.xlu0 %v689, 127
        %v728 = vpop.permute.xlu0 %727
        %vm729 = vcmp.lt.s32.totalorder %v691, 127
        %v730 = vsel %vm729, %v726, 0.0
        %v731 = vsel %vm729, %v728, 0.0
        %732 = vset.pattern.permute.xlu0 2
        %733 = vperm.xlu0 %732, %v692
        %v734 = vpop.permute.xlu0 %733
        %736 = vset.pattern.permute.xlu0 2
        %737 = vperm.xlu0 %736, %v693
        %v738 = vpop.permute.xlu0 %737
        %v740 = vmul.f32 %v734, %v730
        %v741 = vmul.f32 %v738, %v731
        %v742 = vadd.f32 %v723, %v740
        %v743 = vadd.f32 %v724, %v741
        %v744 = vld [vmem:[%s7] sm:$0xff]
        %v745 = vld [vmem:[%s7 + $0x8] sm:$0xff]
        %747 = vset.pattern.permute.xlu0 0
        %748 = vperm.xlu0 %747, %v744
        %v749 = vpop.permute.xlu0 %748
        %752 = vset.pattern.permute.xlu0 0
        %753 = vperm.xlu0 %752, %v745
        %v754 = vpop.permute.xlu0 %753
        %v756 = vadd.f32 %v742, %v749
        %v757 = vadd.f32 %v743, %v754
        %vm758 = vcmp.ge.f32.partialorder %v756, 0.0
        %vm759 = vcmp.ge.f32.partialorder %v757, 0.0
        %v760 = vstv %s517
        %v761 = vmul.f32 %v760, %v756
        %v762 = vmul.f32 %v760, %v757
        %v763 = vsel %vm758, %v756, %v761
        %v764 = vsel %vm759, %v757, %v762
        %v765 = vld [vmem:[%s8] sm:$0xff]
        %v766 = vld [vmem:[%s8 + $0x8] sm:$0xff]
        %v767 = vld [vmem:[%s9] sm:$0xff]
        %v768 = vld [vmem:[%s9 + $0x8] sm:$0xff]
        %v769 = vadd.f32 %v763, %v764
        %770 = vadd.xlane.f32.xlu0 %v769
        %v771 = vpop.xlane.xlu0 %770
        %v772 = vrot.slane %v771, 4
        %v773 = vadd.f32 %v771, %v772
        %v774 = vrot.slane %v773, 2
        %v775 = vadd.f32 %v773, %v774
        %v776 = vrot.slane %v775, 1
        %v777 = vadd.f32 %v775, %v776
        %s778 = vtos %v777
        %v779 = vmul.f32 %v763, %v763
        %v780 = vmul.f32 %v764, %v764
        %v781 = vadd.f32 %v779, %v780
        %782 = vadd.xlane.f32.xlu0 %v781
        %v783 = vpop.xlane.xlu0 %782
        %v784 = vrot.slane %v783, 4
        %v785 = vadd.f32 %v783, %v784
        %v786 = vrot.slane %v785, 2
        %v787 = vadd.f32 %v785, %v786
        %v788 = vrot.slane %v787, 1
        %v789 = vadd.f32 %v787, %v788
        %s790 = vtos %v789
        %v791 = vrcp.pop 2048.0
        %s792 = vtos %v791
        %s793 = smul.f32 %s778, %s792
        %v794 = vrcp.pop 2048.0
        %s795 = vtos %v794
        %s796 = smul.f32 %s790, %s795
        %s797 = smul.f32 %s793, %s793
        %s798 = ssub.f32 %s796, %s797
        %s799 = smax.f32 %s798, 0.0
        %v800 = vstv %s793
        %v801 = vsub.f32 %v763, %v800
        %v802 = vsub.f32 %v764, %v800
        %s803 = sadd.f32 %s799, 1e-08
        %v804 = vstv %s803
        %v805 = vrsqrt.pop %v804
        %s806 = vtos %v805
        %v807 = vstv %s806
        %v808 = vmul.f32 %v801, %v807
        %v809 = vmul.f32 %v802, %v807
        %811 = vset.pattern.permute.xlu0 0
        %812 = vperm.xlu0 %811, %v765
        %v813 = vpop.permute.xlu0 %812
        %816 = vset.pattern.permute.xlu0 0
        %817 = vperm.xlu0 %816, %v766
        %v818 = vpop.permute.xlu0 %817
        %v820 = vmul.f32 %v808, %v813
        %v821 = vmul.f32 %v809, %v818
        %823 = vset.pattern.permute.xlu0 0
        %824 = vperm.xlu0 %823, %v767
        %v825 = vpop.permute.xlu0 %824
        %828 = vset.pattern.permute.xlu0 0
        %829 = vperm.xlu0 %828, %v768
        %v830 = vpop.permute.xlu0 %829
        %v832 = vadd.f32 %v820, %v825
        %v833 = vadd.f32 %v821, %v830
        %v834 = vld [vmem:[%s10] sm:$0xff]
        %v835 = vld [vmem:[%s11] sm:$0xff]
        %837 = vset.pattern.permute.xlu0 0
        %838 = vperm.xlu0 %837, %v835
        %v839 = vpop.permute.xlu0 %838
        %vm841 = vcmask 130048
        %v843 = vsel %vm841, %v834, 0
        %845 = vmatprep.subr.mxu0 0.0
        %846 = vmatpush1.msra.mxu0 0.0
        %847 = vmatprep.subr.mxu0 0.0
        %848 = vmatpush1.msra.mxu0 0.0
        %849 = vmatprep.subr.mxu0 0.0
        %850 = vmatpush1.msra.mxu0 0.0
        %851 = vmatprep.subr.mxu0 0.0
        %852 = vmatpush1.msra.mxu0 0.0
        %853 = vmatprep.subr.mxu0 0.0
        %854 = vmatpush1.msra.mxu0 0.0
        %855 = vmatprep.subr.mxu0 0.0
        %856 = vmatpush1.msra.mxu0 0.0
        %857 = vmatprep.subr.mxu0 0.0
        %858 = vmatpush1.msra.mxu0 0.0
        %859 = vmatprep.subr.mxu0 0.0
        %860 = vmatpush1.msra.mxu0 0.0
        %861 = vmatprep.subr.mxu0 0.0
        %862 = vmatpush1.msra.mxu0 0.0
        %863 = vmatprep.subr.mxu0 0.0
        %864 = vmatpush1.msra.mxu0 0.0
        %865 = vmatprep.subr.mxu0 0.0
        %866 = vmatpush1.msra.mxu0 0.0
        %867 = vmatprep.subr.mxu0 0.0
        %868 = vmatpush1.msra.mxu0 0.0
        %869 = vmatprep.subr.mxu0 0.0
        %870 = vmatpush1.msra.mxu0 0.0
        %871 = vmatprep.subr.mxu0 0.0
        %872 = vmatpush1.msra.mxu0 0.0
        %873 = vmatprep.subr.mxu0 0.0
        %874 = vmatpush1.msra.mxu0 %v833
        %875 = vmatprep.subr.mxu0 0.0
        %876 = vmatpush1.msra.mxu0 %v832
        %877 = vmatprep.subr.mxu0 0.0
        %878 = vmatpush2.msra.mxu0 0.0
        %879 = vmatprep.subr.mxu0 0.0
        %880 = vmatpush2.msra.mxu0 0.0
        %881 = vmatprep.subr.mxu0 0.0
        %882 = vmatpush2.msra.mxu0 0.0
        %883 = vmatprep.subr.mxu0 0.0
        %884 = vmatpush2.msra.mxu0 0.0
        %885 = vmatprep.subr.mxu0 0.0
        %886 = vmatpush2.msra.mxu0 0.0
        %887 = vmatprep.subr.mxu0 0.0
        %888 = vmatpush2.msra.mxu0 0.0
        %889 = vmatprep.subr.mxu0 0.0
        %890 = vmatpush2.msra.mxu0 0.0
        %891 = vmatprep.subr.mxu0 0.0
        %892 = vmatpush2.msra.mxu0 0.0
        %893 = vmatprep.subr.mxu0 0.0
        %894 = vmatpush2.msra.mxu0 0.0
        %895 = vmatprep.subr.mxu0 0.0
        %896 = vmatpush2.msra.mxu0 0.0
        %897 = vmatprep.subr.mxu0 0.0
        %898 = vmatpush2.msra.mxu0 0.0
        %899 = vmatprep.subr.mxu0 0.0
        %900 = vmatpush2.msra.mxu0 0.0
        %901 = vmatprep.subr.mxu0 0.0
        %902 = vmatpush2.msra.mxu0 0.0
        %903 = vmatprep.subr.mxu0 0.0
        %904 = vmatpush2.msra.mxu0 0.0
        %905 = vmatprep.subr.mxu0 0.0
        %906 = vmatpush2.msra.mxu0 0.0
        %907 = vmatprep.subr.mxu0 0.0
        %908 = vmatpush2.msra.mxu0 0.0
        %909 = vmatprep.mubr.f32.mxu0 0.0
        %910 = vmatmul.mubr.f32.gmra.mxu0 %v843
        %v911 = vpop.f32.mrf.mxu0
        %v912 = vadd.f32 %v839, %v911
        %v913 = vpop.f32.mrf.mxu0
        %914 = vdwg.mxu0
        %915 = vst [vmem:[%s503] sm:$0xff] %v912
        %v916 = vld [vmem:[%s12] sm:$0xff]
        %v917 = vld [vmem:[%s13] sm:$0xff]
        %919 = vset.pattern.permute.xlu0 0
        %920 = vperm.xlu0 %919, %v917
        %v921 = vpop.permute.xlu0 %920
        %v924 = vsel %vm841, %v916, 0
        %926 = vmatprep.subr.mxu0 0.0
        %927 = vmatpush1.msra.mxu0 0.0
        %928 = vmatprep.subr.mxu0 0.0
        %929 = vmatpush1.msra.mxu0 0.0
        %930 = vmatprep.subr.mxu0 0.0
        %931 = vmatpush1.msra.mxu0 0.0
        %932 = vmatprep.subr.mxu0 0.0
        %933 = vmatpush1.msra.mxu0 0.0
        %934 = vmatprep.subr.mxu0 0.0
        %935 = vmatpush1.msra.mxu0 0.0
        %936 = vmatprep.subr.mxu0 0.0
        %937 = vmatpush1.msra.mxu0 0.0
        %938 = vmatprep.subr.mxu0 0.0
        %939 = vmatpush1.msra.mxu0 0.0
        %940 = vmatprep.subr.mxu0 0.0
        %941 = vmatpush1.msra.mxu0 0.0
        %942 = vmatprep.subr.mxu0 0.0
        %943 = vmatpush1.msra.mxu0 0.0
        %944 = vmatprep.subr.mxu0 0.0
        %945 = vmatpush1.msra.mxu0 0.0
        %946 = vmatprep.subr.mxu0 0.0
        %947 = vmatpush1.msra.mxu0 0.0
        %948 = vmatprep.subr.mxu0 0.0
        %949 = vmatpush1.msra.mxu0 0.0
        %950 = vmatprep.subr.mxu0 0.0
        %951 = vmatpush1.msra.mxu0 0.0
        %952 = vmatprep.subr.mxu0 0.0
        %953 = vmatpush1.msra.mxu0 0.0
        %954 = vmatprep.subr.mxu0 0.0
        %955 = vmatpush1.msra.mxu0 %v833
        %956 = vmatprep.subr.mxu0 0.0
        %957 = vmatpush1.msra.mxu0 %v832
        %958 = vmatprep.subr.mxu0 0.0
        %959 = vmatpush2.msra.mxu0 0.0
        %960 = vmatprep.subr.mxu0 0.0
        %961 = vmatpush2.msra.mxu0 0.0
        %962 = vmatprep.subr.mxu0 0.0
        %963 = vmatpush2.msra.mxu0 0.0
        %964 = vmatprep.subr.mxu0 0.0
        %965 = vmatpush2.msra.mxu0 0.0
        %966 = vmatprep.subr.mxu0 0.0
        %967 = vmatpush2.msra.mxu0 0.0
        %968 = vmatprep.subr.mxu0 0.0
        %969 = vmatpush2.msra.mxu0 0.0
        %970 = vmatprep.subr.mxu0 0.0
        %971 = vmatpush2.msra.mxu0 0.0
        %972 = vmatprep.subr.mxu0 0.0
        %973 = vmatpush2.msra.mxu0 0.0
        %974 = vmatprep.subr.mxu0 0.0
        %975 = vmatpush2.msra.mxu0 0.0
        %976 = vmatprep.subr.mxu0 0.0
        %977 = vmatpush2.msra.mxu0 0.0
        %978 = vmatprep.subr.mxu0 0.0
        %979 = vmatpush2.msra.mxu0 0.0
        %980 = vmatprep.subr.mxu0 0.0
        %981 = vmatpush2.msra.mxu0 0.0
        %982 = vmatprep.subr.mxu0 0.0
        %983 = vmatpush2.msra.mxu0 0.0
        %984 = vmatprep.subr.mxu0 0.0
        %985 = vmatpush2.msra.mxu0 0.0
        %986 = vmatprep.subr.mxu0 0.0
        %987 = vmatpush2.msra.mxu0 0.0
        %988 = vmatprep.subr.mxu0 0.0
        %989 = vmatpush2.msra.mxu0 0.0
        %990 = vmatprep.mubr.f32.mxu0 0.0
        %991 = vmatmul.mubr.f32.gmra.mxu0 %v924
        %v992 = vpop.f32.mrf.mxu0
        %v993 = vadd.f32 %v921, %v992
        %v994 = vpop.f32.mrf.mxu0
        %995 = vdwg.mxu0
        %996 = vst [vmem:[%s510] sm:$0xff] %v993
        %s997 = sand.u32 %s341, 1
        %s998 = scalar_lea.sflag [#allocation3], %s997
        %s999 = sand.u32 %s341, 1
        %s1000 = smul.addr %s999, 8
        %s1001 = scalar_lea.vmem [#allocation5], %s1000
        %s1002 = sand.u32 %s367, 1
        %s1003 = scalar_lea.sflag [#allocation7], %s1002
        %s1004 = sand.u32 %s367, 1
        %s1005 = smul.addr %s1004, 8
        %s1006 = scalar_lea.vmem [#allocation6], %s1005
        // Predicated region
        $region81: #{depth_conv1d.1} parent=75 // pred_check
          %p1007 = pneg %p351
        $region82: #{depth_conv1d.1} parent=75 // pred_check_branch
          %1009 = sbr.rel (%p1007) target = $region84
        $region83: #{depth_conv1d.1} parent=75 // pred_region
          %s1011 = ssub.s32 128, 128
          %1012 = vsyncadd %s998, %s1011
          %s1013 = smul.addr %s34, 128
          %s1014 = scalar_lea.hbm %s14, %s1013
          %s1016 = sshll.u32 %s1001, 4
          %s1017 = int_to_ptr.vmem [resolvable:$true] %s1016
          %1019 = dma.vmem_to_hbm [thread:$0]  %s1017, 128, %s1014, %s998
        $region84: #{depth_conv1d.1} parent=75 // pred_fallthru
          _
        // Predicated region
        $region85: #{depth_conv1d.1} parent=75 // pred_check
          %p1020 = pneg %p377
        $region86: #{depth_conv1d.1} parent=75 // pred_check_branch
          %1022 = sbr.rel (%p1020) target = $region88
        $region87: #{depth_conv1d.1} parent=75 // pred_region
          %s1024 = ssub.s32 128, 128
          %1025 = vsyncadd %s1003, %s1024
          %s1026 = smul.addr %s34, 128
          %s1027 = scalar_lea.hbm %s15, %s1026
          %s1029 = sshll.u32 %s1006, 4
          %s1030 = int_to_ptr.vmem [resolvable:$true] %s1029
          %1032 = dma.vmem_to_hbm [thread:$0]  %s1030, 128, %s1027, %s1003
        $region88: #{depth_conv1d.1} parent=75 // pred_fallthru
          _
      $region76: #{depth_conv1d.1} parent=5 // pred_fallthru
        _
      %p1033 = scmp.le.s32.totalorder 2, %s29
      // Predicated region
      $region89: #{depth_conv1d.1} parent=5 // pred_check
        %p1034 = pneg %p1033
      $region90: #{depth_conv1d.1} parent=5 // pred_check_branch
        %1036 = sbr.rel (%p1034) target = $region92
      $region91: #{depth_conv1d.1} parent=5 // pred_region
        %s1037 = ssub.s32 %s29, 2
        // Predicated region
        $region93: #{depth_conv1d.1} parent=91 // pred_check
          %p1038 = pneg %p357
        $region94: #{depth_conv1d.1} parent=91 // pred_check_branch
          %1040 = sbr.rel (%p1038) target = $region96
        $region95: #{depth_conv1d.1} parent=91 // pred_region
          %s1041 = sand.u32 %s342, 1
          %s1042 = scalar_lea.sflag [#allocation3], %s1041
          %s1043 = sand.u32 %s342, 1
          %s1044 = smul.addr %s1043, 8
          %s1045 = scalar_lea.vmem [#allocation5], %s1044
          %1046 = dma.done %s1042, 128
        $region96: #{depth_conv1d.1} parent=91 // pred_fallthru
          _
        // Predicated region
        $region97: #{depth_conv1d.1} parent=91 // pred_check
          %p1047 = pneg %p383
        $region98: #{depth_conv1d.1} parent=91 // pred_check_branch
          %1049 = sbr.rel (%p1047) target = $region100
        $region99: #{depth_conv1d.1} parent=91 // pred_region
          %s1050 = sand.u32 %s368, 1
          %s1051 = scalar_lea.sflag [#allocation7], %s1050
          %s1052 = sand.u32 %s368, 1
          %s1053 = smul.addr %s1052, 8
          %s1054 = scalar_lea.vmem [#allocation6], %s1053
          %1055 = dma.done %s1051, 128
        $region100: #{depth_conv1d.1} parent=91 // pred_fallthru
          _
      $region92: #{depth_conv1d.1} parent=5 // pred_fallthru
        _
    $region6: #{depth_conv1d.1} parent=1 // loop_footer
      %s33 = sadd.s32 1, %s29
    $region7: #{depth_conv1d.1} parent=1 // loop_footer_branch
      %28 = sbr.rel target = $region3
    $region8: #{depth_conv1d.1} parent=1 // loop_exit
      _
    %1056 = vsyncpa [#allocation3], 1
    %s1057 = scalar_lea.sflag [#allocation3], 1
    %1058 = vsyncpa %s1057, 1
    %1059 = vsyncpa [#allocation7], 1
    %s1060 = scalar_lea.sflag [#allocation7], 1
    %1061 = vsyncpa %s1060, 1
    %1062 = vsyncpa [#allocation4], 1
    %s1063 = scalar_lea.sflag [#allocation4], 1
    %1064 = vsyncpa %s1063, 1

</llo_original>
